<compile_context>
chip_gen: v5e
topology: v5e:2x2
jax: 0.10.0
libtpu: 0.0.40
codegen_flags: <defaults>
</compile_context>

<pallas_src>
import functools

import jax
import jax.numpy as jnp
from jax.experimental import pallas as pl
from jax.experimental.pallas import tpu as pltpu


_TARGET_BLOCK_BYTES = 4 * 1024 * 1024    # ~4 MiB per block per array
_VMEM_LIMIT_BYTES = 32 * 1024 * 1024     # safe on v5e/v6e/v7x, > v5e 16 MiB default


# ----------------------------- kernels --------------------------------------


def _split_heads_kernel(x_ref, o_ref, *, h, d):
    # x_ref: (1, tn, h*d) contiguous row slab of [b, n, h*d]
    # o_ref: (1, h, tn, d)
    # h is small (static Python unroll); each slice is a plain lane sub-range,
    # so no reshape/relayout is needed and any head_dim (incl. 64) is legal.
    for hh in range(h):
        o_ref[0, hh] = x_ref[0, :, hh * d:(hh + 1) * d]


def _merge_heads_kernel(x_ref, o_ref, *, h, d):
    # x_ref: (1, h, tn, d)
    # o_ref: (1, tn, h*d) contiguous row slab of [b, n, h*d]
    for hh in range(h):
        o_ref[0, :, hh * d:(hh + 1) * d] = x_ref[0, hh]


def _transpose_nh_kernel(x_ref, o_ref):
    # x_ref: (1, tn, h) -> o_ref: (1, h, tn)   (lane-dense along n on the output)
    o_ref[0] = jnp.swapaxes(x_ref[0], 0, 1)


# ----------------------------- helpers --------------------------------------


def _sublane_multiple(dtype):
    """Native sublane packing multiple: 8 (f32), 16 (bf16), 32 (int8/fp8)."""
    itemsize = jnp.dtype(dtype).itemsize
    return max(8, 32 // max(itemsize, 1))


def _pick_tile_n(n, row_bytes, dtype, target_bytes=_TARGET_BLOCK_BYTES):
    """Sequence tile: dtype-aware multiple, VMEM-budgeted, no unbounded fallback."""
    sub = _sublane_multiple(dtype)
    max_rows = max(sub, (target_bytes // max(row_bytes, 1)) // sub * sub)
    if n <= max_rows:
        return n
    # Prefer a divisor of n (avoids a ragged last block).
    t = max_rows
    while t >= sub:
        if n % t == 0:
            return t
        t -= sub
    return max_rows  # ragged last block; Pallas masks the edge


def _bytes(*arrays):
    return sum(int(a.size) * a.dtype.itemsize for a in arrays)


def _copy_cost(x):
    return pl.CostEstimate(flops=0, transcendentals=0, bytes_accessed=2 * _bytes(x))


# ----------------------------- wrapper --------------------------------------


def rearrange(x, pattern, **kwargs):
    """Pallas TPU implementation of the Rearrange module's forward pass."""
    if pattern == 'b n (h d) -> b h n d':
        b, n, hd = x.shape
        h = kwargs['h']
        assert hd % h == 0, "feature dim must be divisible by h"
        d = hd // h
        itemsize = jnp.dtype(x.dtype).itemsize
        tn = _pick_tile_n(n, hd * itemsize, x.dtype)
        return pl.pallas_call(
            functools.partial(_split_heads_kernel, h=h, d=d),
            out_shape=jax.ShapeDtypeStruct((b, h, n, d), x.dtype),
            grid_spec=pltpu.PrefetchScalarGridSpec(
                num_scalar_prefetch=0,
                grid=(b, pl.cdiv(n, tn)),
                in_specs=[pl.BlockSpec((1, tn, hd), lambda bi, ni: (bi, ni, 0))],
                out_specs=pl.BlockSpec((1, h, tn, d),
                                       lambda bi, ni: (bi, 0, ni, 0)),
            ),
            compiler_params=pltpu.CompilerParams(
                dimension_semantics=("parallel", "parallel"),
                vmem_limit_bytes=_VMEM_LIMIT_BYTES),
            cost_estimate=_copy_cost(x),
        )(x)

    elif pattern == 'b h n d -> b n (h d)':
        b, h, n, d = x.shape
        hd = h * d
        itemsize = jnp.dtype(x.dtype).itemsize
        tn = _pick_tile_n(n, hd * itemsize, x.dtype)
        return pl.pallas_call(
            functools.partial(_merge_heads_kernel, h=h, d=d),
            out_shape=jax.ShapeDtypeStruct((b, n, hd), x.dtype),
            grid_spec=pltpu.PrefetchScalarGridSpec(
                num_scalar_prefetch=0,
                grid=(b, pl.cdiv(n, tn)),
                in_specs=[pl.BlockSpec((1, h, tn, d),
                                       lambda bi, ni: (bi, 0, ni, 0))],
                out_specs=pl.BlockSpec((1, tn, hd), lambda bi, ni: (bi, ni, 0)),
            ),
            compiler_params=pltpu.CompilerParams(
                dimension_semantics=("parallel", "parallel"),
                vmem_limit_bytes=_VMEM_LIMIT_BYTES),
            cost_estimate=_copy_cost(x),
        )(x)

    elif pattern == 'b n h -> b h n 1':
        b, n, h = x.shape
        # Tiny tensor; tile n only when it is long and cleanly divisible so the
        # grid keeps a parallel extent > b (v7x megacore) and writes stay
        # lane-dense along n.  Otherwise one (n, h) block per batch element.
        tn = 1024 if (n > 1024 and n % 1024 == 0) else n
        out3 = pl.pallas_call(
            _transpose_nh_kernel,
            out_shape=jax.ShapeDtypeStruct((b, h, n), x.dtype),
            grid_spec=pltpu.PrefetchScalarGridSpec(
                num_scalar_prefetch=0,
                grid=(b, n // tn),
                in_specs=[pl.BlockSpec((1, tn, h), lambda bi, ni: (bi, ni, 0))],
                out_specs=pl.BlockSpec((1, h, tn), lambda bi, ni: (bi, 0, ni)),
            ),
            compiler_params=pltpu.CompilerParams(
                dimension_semantics=("parallel", "parallel"),
                vmem_limit_bytes=_VMEM_LIMIT_BYTES),
            cost_estimate=_copy_cost(x),
        )(x)
        # Trailing unit dim is pure metadata (no data movement).
        return out3.reshape(b, h, n, 1)

    else:
        raise NotImplementedError(f'Pattern {pattern} not implemented')


# ----------------------------- reference ------------------------------------


def _reference(x, pattern, **kwargs):
    if pattern == 'b n (h d) -> b h n d':
        b, n, hd = x.shape
        h = kwargs['h']
        d = hd // h
        return jnp.transpose(x.reshape(b, n, h, d), (0, 2, 1, 3))
    elif pattern == 'b h n d -> b n (h d)':
        b, h, n, d = x.shape
        return jnp.transpose(x, (0, 2, 1, 3)).reshape(b, n, h * d)
    elif pattern == 'b n h -> b h n 1':
        return jnp.transpose(x, (0, 2, 1))[..., None]
    raise NotImplementedError(pattern)


# ----------------------------- demo -----------------------------------------


if __name__ == "__main__":
    key = jax.random.PRNGKey(0)
    k1, k2, k3, k4 = jax.random.split(key, 4)

    b, n, h = 2, 8, 4

    # Pattern 1: 'b n (h d) -> b h n d'  with head_dim=64 (previously rejected)
    d64 = 64
    x1 = jax.random.normal(k1, (b, n, h * d64), jnp.float32)
    y1 = jax.block_until_ready(rearrange(x1, 'b n (h d) -> b h n d', h=h))
    assert y1.shape == (b, h, n, d64)
    assert jnp.array_equal(y1, _reference(x1, 'b n (h d) -> b h n d', h=h))

    # Pattern 1 again with head_dim=128 (lane-aligned head slices)
    d128 = 128
    x1b = jax.random.normal(k4, (b, n, h * d128), jnp.float32)
    y1b = jax.block_until_ready(rearrange(x1b, 'b n (h d) -> b h n d', h=h))
    assert y1b.shape == (b, h, n, d128)
    assert jnp.array_equal(y1b, _reference(x1b, 'b n (h d) -> b h n d', h=h))

    # Pattern 2: 'b h n d -> b n (h d)'
    x2 = jax.random.normal(k2, (b, h, n, d64), jnp.float32)
    y2 = jax.block_until_ready(rearrange(x2, 'b h n d -> b n (h d)'))
    assert y2.shape == (b, n, h * d64)
    assert jnp.array_equal(y2, _reference(x2, 'b h n d -> b n (h d)'))

    # Round trips: split then merge (and vice versa) recover inputs bit-exactly.
    rt1 = jax.block_until_ready(rearrange(y1, 'b h n d -> b n (h d)'))
    assert jnp.array_equal(rt1, x1)
    rt2 = jax.block_until_ready(rearrange(y1b, 'b h n d -> b n (h d)'))
    assert jnp.array_equal(rt2, x1b)

    # Pattern 3: 'b n h -> b h n 1'
    x3 = jax.random.normal(k3, (b, n, h), jnp.float32)
    y3 = jax.block_until_ready(rearrange(x3, 'b n h -> b h n 1'))
    assert y3.shape == (b, h, n, 1)
    assert jnp.array_equal(y3, _reference(x3, 'b n h -> b h n 1'))

    print("KERNEL_OK")
</pallas_src>

<mosaic_0001>
module attributes {stable_mosaic.version = 11 : i64} {
  func.func @_split_heads_kernel(%arg0: i32, %arg1: i32, %arg2: memref<1x8x256xf32, #tpu.memory_space<vmem>>, %arg3: memref<1x4x8x64xf32, #tpu.memory_space<vmem>>) attributes {dimension_semantics = [#tpu.dimension_semantics<parallel>, #tpu.dimension_semantics<parallel>], iteration_bounds = array<i64: 2, 1>, scalar_prefetch = 0 : i64, scratch_operands = 0 : i64, tpu.core_type = #tpu.core_type<tc>, window_params = [{transform_indices = @transform_0, window_bounds = array<i64: 1, 8, 256>}, {transform_indices = @transform_1, window_bounds = array<i64: 1, 4, 8, 64>}]} {
    %c0 = arith.constant 0 : index
    %c0_0 = arith.constant 0 : index
    %c0_1 = arith.constant 0 : index
    %0 = vector.load %arg2[%c0, %c0_0, %c0_1] : memref<1x8x256xf32, #tpu.memory_space<vmem>>, vector<1x8x64xf32>
    %1 = vector.shape_cast %0 : vector<1x8x64xf32> to vector<8x64xf32>
    %c0_2 = arith.constant 0 : index
    %c0_3 = arith.constant 0 : index
    %c0_4 = arith.constant 0 : index
    %c0_5 = arith.constant 0 : index
    %2 = vector.load %arg3[%c0_2, %c0_3, %c0_4, %c0_5] : memref<1x4x8x64xf32, #tpu.memory_space<vmem>>, vector<1x1x8x64xf32>
    %3 = vector.shape_cast %2 : vector<1x1x8x64xf32> to vector<8x64xf32>
    %4 = vector.shape_cast %1 : vector<8x64xf32> to vector<1x1x8x64xf32>
    tpu.vector_store %arg3[%c0_2, %c0_3, %c0_4, %c0_5], %4 {strides = array<i32>} : memref<1x4x8x64xf32, #tpu.memory_space<vmem>>, vector<1x1x8x64xf32>,
    %c0_6 = arith.constant 0 : index
    %c0_7 = arith.constant 0 : index
    %c64 = arith.constant 64 : index
    %5 = vector.load %arg2[%c0_6, %c0_7, %c64] : memref<1x8x256xf32, #tpu.memory_space<vmem>>, vector<1x8x64xf32>
    %6 = vector.shape_cast %5 : vector<1x8x64xf32> to vector<8x64xf32>
    %c0_8 = arith.constant 0 : index
    %c1 = arith.constant 1 : index
    %c0_9 = arith.constant 0 : index
    %c0_10 = arith.constant 0 : index
    %7 = vector.load %arg3[%c0_8, %c1, %c0_9, %c0_10] : memref<1x4x8x64xf32, #tpu.memory_space<vmem>>, vector<1x1x8x64xf32>
    %8 = vector.shape_cast %7 : vector<1x1x8x64xf32> to vector<8x64xf32>
    %9 = vector.shape_cast %6 : vector<8x64xf32> to vector<1x1x8x64xf32>
    tpu.vector_store %arg3[%c0_8, %c1, %c0_9, %c0_10], %9 {strides = array<i32>} : memref<1x4x8x64xf32, #tpu.memory_space<vmem>>, vector<1x1x8x64xf32>,
    %c0_11 = arith.constant 0 : index
    %c0_12 = arith.constant 0 : index
    %c128 = arith.constant 128 : index
    %10 = vector.load %arg2[%c0_11, %c0_12, %c128] : memref<1x8x256xf32, #tpu.memory_space<vmem>>, vector<1x8x64xf32>
    %11 = vector.shape_cast %10 : vector<1x8x64xf32> to vector<8x64xf32>
    %c0_13 = arith.constant 0 : index
    %c2 = arith.constant 2 : index
    %c0_14 = arith.constant 0 : index
    %c0_15 = arith.constant 0 : index
    %12 = vector.load %arg3[%c0_13, %c2, %c0_14, %c0_15] : memref<1x4x8x64xf32, #tpu.memory_space<vmem>>, vector<1x1x8x64xf32>
    %13 = vector.shape_cast %12 : vector<1x1x8x64xf32> to vector<8x64xf32>
    %14 = vector.shape_cast %11 : vector<8x64xf32> to vector<1x1x8x64xf32>
    tpu.vector_store %arg3[%c0_13, %c2, %c0_14, %c0_15], %14 {strides = array<i32>} : memref<1x4x8x64xf32, #tpu.memory_space<vmem>>, vector<1x1x8x64xf32>,
    %c0_16 = arith.constant 0 : index
    %c0_17 = arith.constant 0 : index
    %c192 = arith.constant 192 : index
    %15 = vector.load %arg2[%c0_16, %c0_17, %c192] : memref<1x8x256xf32, #tpu.memory_space<vmem>>, vector<1x8x64xf32>
    %16 = vector.shape_cast %15 : vector<1x8x64xf32> to vector<8x64xf32>
    %c0_18 = arith.constant 0 : index
    %c3 = arith.constant 3 : index
    %c0_19 = arith.constant 0 : index
    %c0_20 = arith.constant 0 : index
    %17 = vector.load %arg3[%c0_18, %c3, %c0_19, %c0_20] : memref<1x4x8x64xf32, #tpu.memory_space<vmem>>, vector<1x1x8x64xf32>
    %18 = vector.shape_cast %17 : vector<1x1x8x64xf32> to vector<8x64xf32>
    %19 = vector.shape_cast %16 : vector<8x64xf32> to vector<1x1x8x64xf32>
    tpu.vector_store %arg3[%c0_18, %c3, %c0_19, %c0_20], %19 {strides = array<i32>} : memref<1x4x8x64xf32, #tpu.memory_space<vmem>>, vector<1x1x8x64xf32>,
    return
  }
  func.func @transform_0(%arg0: i32, %arg1: i32) -> (i32, i32, i32) {
    %c0_i32 = arith.constant 0 : i32
    %c0_i32_0 = arith.constant 0 : i32
    return %arg0, %arg1, %c0_i32 : i32, i32, i32
  }
  func.func @transform_1(%arg0: i32, %arg1: i32) -> (i32, i32, i32, i32) {
    %c0_i32 = arith.constant 0 : i32
    %c0_i32_0 = arith.constant 0 : i32
    %c0_i32_1 = arith.constant 0 : i32
    return %arg0, %c0_i32, %arg1, %c0_i32_0 : i32, i32, i32, i32
  }
}

</mosaic_0001>

<llo_original>
// kernel: tpu_custom_call.1
$region0: #{tpu_custom_call.1}
  #allocation0 [shape = 'u32[]', space=smem, size = 0x4, offset = 0x4, fixed_abs, tag = 'smem constant byte address 0x4 - core index']
  #allocation1 [shape = 'u32[72,128]{1,0:T(1,128)}', space=vmem, size = 0x9000, scoped, tag = 'internal scratch']
  %s0 = inlined_call_operand.hbm [shape: f32[2,8,256], index: 0, kind: input, shape index: {}]
  %s1 = inlined_call_operand.hbm [shape: f32[2,4,8,64], index: 1, kind: output, shape index: {}]
  %s2 = sld [smem:[#allocation0]]
  $region41: #{tpu_custom_call.1} parent=0
    _
  %s4 = ssub.s32 1, %s2
  %s5 = scalar_select 0, %s4, %s2
  $region1: #{tpu_custom_call.1} parent=0
    #allocation2 [shape = 'u8[16384]{0}', space=vmem, size = 0x4000, scoped, tag = 'input window, operand 0']
    #allocation3 [shape = 's32[2]{0}', space=sflag, size = 0x8, scoped, tag = 'scoped memory for tpu_custom_call.1']
    #allocation4 [shape = 's32[2]{0}', space=sflag, size = 0x8, scoped, tag = 'scoped memory for tpu_custom_call.1']
    #allocation5 [shape = 'u8[32768]{0}', space=vmem, size = 0x8000, scoped, tag = 'output window, operand 0']
    %6 = vsyncpa [#allocation3], 0
    %s7 = scalar_lea.sflag [#allocation3], 1
    %8 = vsyncpa %s7, 0
    %9 = vsyncpa [#allocation4], 0
    %s10 = scalar_lea.sflag [#allocation4], 1
    %11 = vsyncpa %s10, 0
    loop: start=0, step=1, limit=4
    $region2: #{tpu_custom_call.1} parent=1 // loop_pre_header
      _
    $region3: #{tpu_custom_call.1} parent=1 // loop_header
      %s13 = sphi 0, %s17
      %p14 = scmp.ge.s32.totalorder %s13, 4
      %s20 = sphi 0, %s32
      %s21 = sphi 0, %s28
      %s22 = sphi 0, %s20
      %s23 = sphi 0, %s21
      %s24 = sphi 0, %s22
      %s25 = sphi 0, %s23
      %s37 = sphi 0, %s39
      %s40 = sphi 0, %s37
      %s41 = sphi 0, %s40
      %s57 = sphi 0, %s41
      %s65 = sphi 0, %s67
      %s68 = sphi 0, %s65
      %s69 = sphi 0, %s68
      %s85 = sphi 0, %s69
    $region4: #{tpu_custom_call.1} parent=1 // loop_header_branch
      %16 = sbr.rel (%p14) target = $region8
    $region5: #{tpu_custom_call.1} parent=1 // loop_body
      %s18 = ssub.s32 %s13, 1
      %s19 = ssub.s32 %s13, 2
      %s26 = sadd.s32 1, %s21
      %p27 = scmp.ge.s32.totalorder %s26, 1
      %s28 = scalar_select %p27, 0, %s26
      %s29 = sadd.s32 1, %s20
      %s30 = scalar_select %p27, %s29, %s20
      %p31 = scmp.ge.s32.totalorder %s30, 2
      %s32 = scalar_select %p31, 0, %s30
      %s33 = ssub.s32 %s20, %s32
      %s34 = ssub.s32 %s21, %s28
      %s35 = sor.u32 %s33, %s34
      %p36 = scmp.eq.s32.totalorder %s35, 0
      %s38 = sadd.s32 %s37, 1
      %s39 = scalar_select %p36, %s37, %s38
      %p42 = pneg %p36
      %p43 = scmp.eq.s32.totalorder %s13, 1
      %p44 = por %p42, %p43
      %p45 = scmp.ne.s32.totalorder %s37, %s40
      %p46 = scmp.eq.s32.totalorder %s13, 0
      %p47 = por %p45, %p46
      %p48 = scmp.ne.s32.totalorder %s37, %s40
      %p49 = scmp.eq.s32.totalorder %s18, 1
      %p50 = por %p48, %p49
      %p51 = scmp.ne.s32.totalorder %s40, %s41
      %p52 = scmp.eq.s32.totalorder %s18, 0
      %p53 = por %p51, %p52
      %p54 = scmp.ne.s32.totalorder %s40, %s41
      %p55 = scmp.eq.s32.totalorder %s19, 1
      %p56 = por %p54, %p55
      %p58 = scmp.ne.s32.totalorder %s41, %s57
      %p59 = scmp.eq.s32.totalorder %s19, 0
      %p60 = por %p58, %p59
      %s61 = ssub.s32 %s20, %s32
      %s62 = ssub.s32 %s21, %s28
      %s63 = sor.u32 %s61, %s62
      %p64 = scmp.eq.s32.totalorder %s63, 0
      %s66 = sadd.s32 %s65, 1
      %s67 = scalar_select %p64, %s65, %s66
      %p70 = pneg %p64
      %p71 = scmp.eq.s32.totalorder %s13, 1
      %p72 = por %p70, %p71
      %p73 = scmp.ne.s32.totalorder %s65, %s68
      %p74 = scmp.eq.s32.totalorder %s13, 0
      %p75 = por %p73, %p74
      %p76 = scmp.ne.s32.totalorder %s65, %s68
      %p77 = scmp.eq.s32.totalorder %s18, 1
      %p78 = por %p76, %p77
      %p79 = scmp.ne.s32.totalorder %s68, %s69
      %p80 = scmp.eq.s32.totalorder %s18, 0
      %p81 = por %p79, %p80
      %p82 = scmp.ne.s32.totalorder %s68, %s69
      %p83 = scmp.eq.s32.totalorder %s19, 1
      %p84 = por %p82, %p83
      %p86 = scmp.ne.s32.totalorder %s69, %s85
      %p87 = scmp.eq.s32.totalorder %s19, 0
      %p88 = por %p86, %p87
      %p89 = scmp.le.s32.totalorder 1, %s13
      %p90 = scmp.lt.s32.totalorder %s13, 3
      %p91 = pnand %p89, %p90
      %p92 = pneg %p91
      // Predicated region
      $region9: #{tpu_custom_call.1} parent=5 // pred_check
        _
      $region10: #{tpu_custom_call.1} parent=5 // pred_check_branch
        %94 = sbr.rel (%p91) target = $region12
      $region11: #{tpu_custom_call.1} parent=5 // pred_region
        %s95 = ssub.s32 %s13, 1
      $region12: #{tpu_custom_call.1} parent=5 // pred_fallthru
        _
      %p96 = scmp.lt.s32.totalorder %s13, 2
      // Predicated region
      $region13: #{tpu_custom_call.1} parent=5 // pred_check
        %p97 = pneg %p96
      $region14: #{tpu_custom_call.1} parent=5 // pred_check_branch
        %99 = sbr.rel (%p97) target = $region16
      $region15: #{tpu_custom_call.1} parent=5 // pred_region
        // Predicated region
        $region17: #{tpu_custom_call.1} parent=15 // pred_check
          %p100 = pneg %p47
        $region18: #{tpu_custom_call.1} parent=15 // pred_check_branch
          %102 = sbr.rel (%p100) target = $region20
        $region19: #{tpu_custom_call.1} parent=15 // pred_region
          %s103 = sand.u32 %s37, 1
          %s104 = scalar_lea.sflag [#allocation3], %s103
          %s105 = sand.u32 %s37, 1
          %s106 = smul.addr %s105, 16
          %s107 = scalar_lea.vmem [#allocation2], %s106
          %109 = vsyncadd %s104, 0
          %s110 = smul.addr %s21, 2
          %s111 = smul.addr %s20, 2
          %s112 = sadd.s32 %s110, %s111
          %s113 = smul.addr %s112, 8
          %s114 = scalar_lea.hbm %s0, %s113
          %s116 = sshll.u32 %s114, 4
          %s117 = int_to_ptr.hbm [resolvable:$true] %s116
          %s118 = sshll.u32 %s107, 4
          %s119 = int_to_ptr.vmem [resolvable:$true] %s118
          %121 = dma.hbm_to_vmem [thread:$0]  %s117, 256, %s119, %s104
        $region20: #{tpu_custom_call.1} parent=15 // pred_fallthru
          _
      $region16: #{tpu_custom_call.1} parent=5 // pred_fallthru
        _
      %p122 = scmp.le.s32.totalorder 1, %s13
      %p123 = scmp.lt.s32.totalorder %s13, 3
      %p124 = pnand %p122, %p123
      %p125 = pneg %p124
      // Predicated region
      $region21: #{tpu_custom_call.1} parent=5 // pred_check
        _
      $region22: #{tpu_custom_call.1} parent=5 // pred_check_branch
        %127 = sbr.rel (%p124) target = $region24
      $region23: #{tpu_custom_call.1} parent=5 // pred_region
        %s128 = ssub.s32 %s13, 1
        %s129 = sand.u32 %s40, 1
        %s130 = scalar_lea.sflag [#allocation3], %s129
        %s131 = sand.u32 %s40, 1
        %s132 = smul.addr %s131, 16
        %s133 = scalar_lea.vmem [#allocation2], %s132
        // Predicated region
        $region25: #{tpu_custom_call.1} parent=23 // pred_check
          %p134 = pneg %p53
        $region26: #{tpu_custom_call.1} parent=23 // pred_check_branch
          %136 = sbr.rel (%p134) target = $region28
        $region27: #{tpu_custom_call.1} parent=23 // pred_region
          %138 = dma.done %s130, 256
        $region28: #{tpu_custom_call.1} parent=23 // pred_fallthru
          _
        %s139 = sand.u32 %s40, 1
        %s140 = scalar_lea.sflag [#allocation3], %s139
        %s141 = sand.u32 %s40, 1
        %s142 = smul.addr %s141, 16
        %s143 = scalar_lea.vmem [#allocation2], %s142
        %p144 = pneg %p53
        %p145 = pneg %p50
        %p146 = pneg %p81
        %p147 = pneg %p78
        %s148 = sand.u32 %s68, 1
        %s149 = scalar_lea.sflag [#allocation4], %s148
        %s150 = sand.u32 %s68, 1
        %s151 = smul.addr %s150, 32
        %s152 = scalar_lea.vmem [#allocation5], %s151
        %v153 = vld [vmem:[%s133] sm:$0xff]
        %vm154 = vcmask 523264
        %155 = vst.msk [vmem:[%s152] sm:$0xff] %vm154, %v153
        %v156 = vld [vmem:[%s133] sm:$0xff]
        %158 = vrot.lane.b32.xlu0 %v156, 64
        %v159 = vpop.permute.xlu0 %158
        %s161 = scalar_lea.vmem %s152, 8 [#allocation5]
        %162 = vst.msk [vmem:[%s161] sm:$0xff] %vm154, %v159
        %v163 = vld [vmem:[%s133 + $0x8] sm:$0xff]
        %s164 = scalar_lea.vmem %s152, 16 [#allocation5]
        %165 = vst.msk [vmem:[%s164] sm:$0xff] %vm154, %v163
        %v166 = vld [vmem:[%s133 + $0x8] sm:$0xff]
        %168 = vrot.lane.b32.xlu0 %v166, 64
        %v169 = vpop.permute.xlu0 %168
        %s171 = scalar_lea.vmem %s152, 24 [#allocation5]
        %172 = vst.msk [vmem:[%s171] sm:$0xff] %vm154, %v169
        %s173 = sand.u32 %s68, 1
        %s174 = scalar_lea.sflag [#allocation4], %s173
        %s175 = sand.u32 %s68, 1
        %s176 = smul.addr %s175, 32
        %s177 = scalar_lea.vmem [#allocation5], %s176
        // Predicated region
        $region29: #{tpu_custom_call.1} parent=23 // pred_check
          %p178 = pneg %p78
        $region30: #{tpu_custom_call.1} parent=23 // pred_check_branch
          %180 = sbr.rel (%p178) target = $region32
        $region31: #{tpu_custom_call.1} parent=23 // pred_region
          %182 = vsyncadd %s174, 0
          %s183 = smul.addr %s22, 4
          %s184 = sadd.s32 %s23, %s183
          %s185 = smul.addr %s184, 8
          %s186 = scalar_lea.hbm %s1, %s185
          %s187 = sshll.u32 %s177, 4
          %s188 = int_to_ptr.vmem [resolvable:$true] %s187
          %s189 = sshll.u32 %s186, 4
          %s190 = int_to_ptr.hbm [resolvable:$true] %s189
          %195 = dma.vmem_to_hbm [thread:$0]  %s188, 512, %s190, %s174, 128, 128, 8
        $region32: #{tpu_custom_call.1} parent=23 // pred_fallthru
          _
      $region24: #{tpu_custom_call.1} parent=5 // pred_fallthru
        _
      %p196 = scmp.le.s32.totalorder 2, %s13
      // Predicated region
      $region33: #{tpu_custom_call.1} parent=5 // pred_check
        %p197 = pneg %p196
      $region34: #{tpu_custom_call.1} parent=5 // pred_check_branch
        %199 = sbr.rel (%p197) target = $region36
      $region35: #{tpu_custom_call.1} parent=5 // pred_region
        %s200 = ssub.s32 %s13, 2
        // Predicated region
        $region37: #{tpu_custom_call.1} parent=35 // pred_check
          %p201 = pneg %p84
        $region38: #{tpu_custom_call.1} parent=35 // pred_check_branch
          %203 = sbr.rel (%p201) target = $region40
        $region39: #{tpu_custom_call.1} parent=35 // pred_region
          %s204 = sand.u32 %s69, 1
          %s205 = scalar_lea.sflag [#allocation4], %s204
          %s206 = sand.u32 %s69, 1
          %s207 = smul.addr %s206, 32
          %s208 = scalar_lea.vmem [#allocation5], %s207
          %210 = dma.done %s205, 512
        $region40: #{tpu_custom_call.1} parent=35 // pred_fallthru
          _
      $region36: #{tpu_custom_call.1} parent=5 // pred_fallthru
        _
    $region6: #{tpu_custom_call.1} parent=1 // loop_footer
      %s17 = sadd.s32 1, %s13
    $region7: #{tpu_custom_call.1} parent=1 // loop_footer_branch
      %12 = sbr.rel target = $region3
    $region8: #{tpu_custom_call.1} parent=1 // loop_exit
      _
    %211 = vsyncpa [#allocation3], 1
    %s212 = scalar_lea.sflag [#allocation3], 1
    %213 = vsyncpa %s212, 1
    %214 = vsyncpa [#allocation4], 1
    %s215 = scalar_lea.sflag [#allocation4], 1
    %216 = vsyncpa %s215, 1

</llo_original>
